<compile_context>
chip_gen: v7x
topology: tpu7x:2x2x1
jax: 0.10.0
libtpu: 0.0.40
codegen_flags: <defaults>
</compile_context>

<pallas_src>
import functools

import jax
import jax.numpy as jnp
from jax.experimental import pallas as pl
from jax.experimental.pallas import tpu as pltpu

_LANE = 128
_SUBLANE = 8


def _round_up(n, m):
    return ((n + m - 1) // m) * m


# ----------------------------- Pallas kernel --------------------------------


def _make_fused_ffn_kernel(num_hidden):
    """relu(x@W0+b0) -> ... -> x@Wout+bout, fully unrolled in one kernel body."""

    def kernel(x_ref, *refs):
        *wb_refs, o_ref = refs
        h = x_ref[...]                                   # (tile_b, Din) compute_dtype
        for li in range(num_hidden):
            w = wb_refs[2 * li][...]                     # (prev, hid_pad) compute_dtype
            b = wb_refs[2 * li + 1][...]                 # (1, hid_pad) f32
            y = jnp.dot(h, w, preferred_element_type=jnp.float32) + b
            # BatchNorm already folded into w/b; Dropout is identity in eval mode.
            h = jnp.maximum(y, 0.0).astype(w.dtype)      # stay in compute_dtype for MXU
        w = wb_refs[2 * num_hidden][...]
        b = wb_refs[2 * num_hidden + 1][...]
        y = jnp.dot(h, w, preferred_element_type=jnp.float32) + b
        o_ref[...] = y.astype(o_ref.dtype)

    return kernel


# ------------------------------ host wrapper ---------------------------------


def _resident_spec(shape):
    """Constant-index block (weights/biases): fetched once and kept resident.

    Requests single-buffering (the default pipeline double-buffers every operand,
    doubling resident-weight VMEM).  Returns (spec, buffer_count) so the VMEM
    estimate stays honest if the kwarg is unavailable.
    """
    idx = lambda i: (0, 0)
    try:
        return pl.BlockSpec(shape, idx, pipeline_mode=pl.Buffered(1)), 1
    except Exception:  # older jax: no pipeline_mode kwarg / Buffered(1) rejected
        return pl.BlockSpec(shape, idx), 2


def _vmem_cap_bytes():
    """Generation-aware scoped-VMEM cap (~96 MiB on v5e/v6e, ~48 MiB on v7x)."""
    try:
        return int(0.75 * pltpu.get_tpu_info().vmem_capacity_bytes)
    except Exception:
        return 48 * 1024 * 1024  # safe fallback for v7x (64 MiB physical)


def _vmem_limit_bytes(tile_b, din, c_pad, weights, biases, x_itemsize, weight_bufs):
    """Residency estimate (incl. weight buffer count) -> explicit scoped-VMEM limit."""
    wb = weight_bufs * (
        sum(int(w.size) * w.dtype.itemsize for w in weights)
        + sum(int(b.size) * b.dtype.itemsize for b in biases))
    max_n = max(int(w.shape[1]) for w in weights)
    act = 2 * tile_b * max_n * 4                                   # f32 intermediates (rough)
    io = 2 * tile_b * din * x_itemsize + 2 * tile_b * c_pad * 4    # double-buffered x / out
    est = wb + act + io
    cap = _vmem_cap_bytes()
    assert est <= cap, (
        "FFN weights/activations exceed the single-kernel VMEM budget; "
        "a K/N-streamed variant is required.")  # TODO(synk): stream weight tiles.
    return int(min(max(2 * est, 16 * 1024 * 1024), cap))


def _pick_tile_b(batch):
    """Auto tile_b: whole batch when small; >=4 grid steps (>=2/TC on v7x) when large,
    with tiles clamped to [128, 512] so single-TC parts amortize per-step overhead."""
    if batch < 4 * _LANE:
        return _round_up(min(batch, 512), _SUBLANE)
    t = _round_up(pl.cdiv(batch, 4), _SUBLANE)
    return int(min(512, max(128, t)))


def _fused_ffn_pallas(x_pad, weights, biases, *, tile_b, out_dtype):
    B_pad, din = x_pad.shape
    c_pad = int(weights[-1].shape[1])
    num_hidden = len(weights) - 1
    grid = (B_pad // tile_b,)

    in_specs = [pl.BlockSpec((tile_b, din), lambda i: (i, 0))]
    flat_wb = []
    weight_bufs = 1
    for w, b in zip(weights, biases):
        k, n = int(w.shape[0]), int(w.shape[1])
        w_spec, nbuf_w = _resident_spec((k, n))
        b_spec, nbuf_b = _resident_spec((1, n))
        weight_bufs = max(weight_bufs, nbuf_w, nbuf_b)
        in_specs += [w_spec, b_spec]
        flat_wb += [w, b]

    return pl.pallas_call(
        _make_fused_ffn_kernel(num_hidden),
        out_shape=jax.ShapeDtypeStruct((B_pad, c_pad), out_dtype),
        grid_spec=pltpu.PrefetchScalarGridSpec(
            num_scalar_prefetch=0,
            grid=grid,
            in_specs=in_specs,
            out_specs=pl.BlockSpec((tile_b, c_pad), lambda i: (i, 0)),
        ),
        compiler_params=pltpu.CompilerParams(
            dimension_semantics=("parallel",),   # batch tiles shard across v7x's 2 TCs
            vmem_limit_bytes=_vmem_limit_bytes(
                tile_b, din, c_pad, weights, biases,
                x_pad.dtype.itemsize, weight_bufs),
        ),
    )(x_pad, *flat_wb)


@functools.partial(jax.jit, static_argnames=("tile_b", "num_classes"))
def _forward_jit(x, fused_params, *, tile_b, num_classes):
    weights = [p["w"] for p in fused_params]
    biases = [p["b"] for p in fused_params]
    compute_dtype = weights[0].dtype

    B, din = x.shape
    assert din == int(weights[0].shape[0]), "input_dim mismatch with folded params"
    B_pad = _round_up(B, tile_b)

    xc = x.astype(compute_dtype)                 # bf16: halves x DMA into the kernel
    if B_pad != B:                               # pad batch only (no feature padding)
        xc = jnp.pad(xc, ((0, B_pad - B), (0, 0)))

    # Output stays f32 (lane-dense 128-wide block); bf16 output is an optional saving.
    logits_pad = _fused_ffn_pallas(xc, weights, biases,
                                   tile_b=tile_b, out_dtype=jnp.float32)
    return logits_pad[:B, :num_classes]


def ffn_classifier_forward(x, fused_params, *, num_classes, tile_b=None):
    """x: [B, input_dim] float32. fused_params: list of {'w','b'} (folded + lane-padded)."""
    if tile_b is None:
        tile_b = _pick_tile_b(int(x.shape[0]))
    assert tile_b % _SUBLANE == 0, "tile_b must be a multiple of 8"
    return _forward_jit(x, fused_params, tile_b=int(tile_b), num_classes=int(num_classes))


# --------------------------- parameter construction --------------------------


def init_ffn_params(key, input_dim, hidden_dims, num_classes, dtype=jnp.float32):
    """Raw params matching the PyTorch module (weights stored as [in, out])."""
    params = []
    prev = input_dim
    for hdim in hidden_dims:
        key, kw, km, kv = jax.random.split(key, 4)
        limit = (6.0 / (prev + hdim)) ** 0.5                  # xavier-uniform-like
        w = jax.random.uniform(kw, (prev, hdim), dtype, -limit, limit)
        params.append(dict(
            w=w,
            b=jnp.zeros((hdim,), dtype),                      # nn.init.zeros_
            gamma=jnp.ones((hdim,), dtype),
            beta=jnp.zeros((hdim,), dtype),
            running_mean=0.1 * jax.random.normal(km, (hdim,), dtype),
            running_var=1.0 + 0.1 * jax.random.uniform(kv, (hdim,), dtype),
        ))
        prev = hdim
    key, kw = jax.random.split(key)
    limit = (6.0 / (prev + num_classes)) ** 0.5
    params.append(dict(
        w=jax.random.uniform(kw, (prev, num_classes), dtype, -limit, limit),
        b=jnp.zeros((num_classes,), dtype),
    ))
    return params


def fold_and_pad_params(raw_params, input_dim, hidden_dims, num_classes,
                        compute_dtype=jnp.bfloat16, eps=1e-5):
    """Fold eval-mode BN into W/b; zero-pad hidden/output feature dims to 128 lanes.

    The first layer's K dim stays at the real input_dim so x needs no feature padding
    (full-extent blocks are legal), avoiding a host-side x_pad HBM round-trip.
    """
    fused = []
    prev_real, prev_store = input_dim, input_dim
    for layer in raw_params[:-1]:
        w, b = layer["w"], layer["b"]
        inv = layer["gamma"] / jnp.sqrt(layer["running_var"] + eps)
        w_f = w * inv[None, :]
        b_f = (b - layer["running_mean"]) * inv + layer["beta"]
        hdim = int(w.shape[1])
        hdim_pad = _round_up(hdim, _LANE)
        w_pad = jnp.zeros((prev_store, hdim_pad), compute_dtype)
        w_pad = w_pad.at[:prev_real, :hdim].set(w_f.astype(compute_dtype))
        b_pad = jnp.zeros((1, hdim_pad), jnp.float32)
        b_pad = b_pad.at[0, :hdim].set(b_f.astype(jnp.float32))
        fused.append(dict(w=w_pad, b=b_pad))
        prev_real, prev_store = hdim, hdim_pad
    last = raw_params[-1]
    c_pad = _round_up(num_classes, _LANE)
    w_pad = jnp.zeros((prev_store, c_pad), compute_dtype)
    w_pad = w_pad.at[:prev_real, :num_classes].set(last["w"].astype(compute_dtype))
    b_pad = jnp.zeros((1, c_pad), jnp.float32)
    b_pad = b_pad.at[0, :num_classes].set(last["b"].astype(jnp.float32))
    fused.append(dict(w=w_pad, b=b_pad))
    return fused


# ------------------------------- pure-JAX ref ---------------------------------


def ffn_classifier_ref(x, raw_params, eps=1e-5):
    hp = jax.lax.Precision.HIGHEST
    h = x
    for layer in raw_params[:-1]:
        y = jnp.dot(h, layer["w"], precision=hp) + layer["b"]
        inv = layer["gamma"] / jnp.sqrt(layer["running_var"] + eps)
        y = (y - layer["running_mean"]) * inv + layer["beta"]
        h = jnp.maximum(y, 0.0)
    last = raw_params[-1]
    return jnp.dot(h, last["w"], precision=hp) + last["b"]


# ---------------------------------- main --------------------------------------


if __name__ == "__main__":
    key = jax.random.PRNGKey(0)

    # Small, deterministic example shapes (padded internally: features -> 128 lanes).
    batch = 64
    input_dim = 96
    hidden_dims = (64, 32)
    num_classes = 5

    kx, kp = jax.random.split(key)
    x = jax.random.normal(kx, (batch, input_dim), jnp.float32)

    raw_params = init_ffn_params(kp, input_dim, hidden_dims, num_classes)
    # bf16 compute by default (native MXU input on v5e/v6e/v7x); f32 accumulation.
    fused_params = fold_and_pad_params(raw_params, input_dim, hidden_dims, num_classes,
                                       compute_dtype=jnp.bfloat16)

    out = ffn_classifier_forward(x, fused_params, num_classes=num_classes)
    out = jax.block_until_ready(out)

    ref = ffn_classifier_ref(x, raw_params)
    assert out.shape == (batch, num_classes), out.shape
    # bf16 inputs / f32 accumulation vs. a HIGHEST-precision f32 reference.
    assert jnp.allclose(out, ref, atol=5e-2, rtol=5e-2), (
        "mismatch vs reference; max abs diff = %f" % float(jnp.max(jnp.abs(out - ref))))

    print("KERNEL_OK")
</pallas_src>

<mosaic_0001>
module attributes {stable_mosaic.version = 11 : i64} {
  func.func @kernel(%arg0: i32, %arg1: memref<64x96xbf16, #tpu.memory_space<vmem>>, %arg2: memref<96x128xbf16, #tpu.memory_space<vmem>>, %arg3: memref<1x128xf32, #tpu.memory_space<vmem>>, %arg4: memref<128x128xbf16, #tpu.memory_space<vmem>>, %arg5: memref<1x128xf32, #tpu.memory_space<vmem>>, %arg6: memref<128x128xbf16, #tpu.memory_space<vmem>>, %arg7: memref<1x128xf32, #tpu.memory_space<vmem>>, %arg8: memref<64x128xf32, #tpu.memory_space<vmem>>) attributes {dimension_semantics = [#tpu.dimension_semantics<parallel>], iteration_bounds = array<i64: 1>, scalar_prefetch = 0 : i64, scratch_operands = 0 : i64, tpu.core_type = #tpu.core_type<tc>, window_params = [{transform_indices = @transform_0, window_bounds = array<i64: 64, 96>}, {pipeline_mode = #tpu.pipeline_mode<synchronous>, transform_indices = @transform_1, window_bounds = array<i64: 96, 128>}, {pipeline_mode = #tpu.pipeline_mode<synchronous>, transform_indices = @transform_2, window_bounds = array<i64: 1, 128>}, {pipeline_mode = #tpu.pipeline_mode<synchronous>, transform_indices = @transform_3, window_bounds = array<i64: 128, 128>}, {pipeline_mode = #tpu.pipeline_mode<synchronous>, transform_indices = @transform_4, window_bounds = array<i64: 1, 128>}, {pipeline_mode = #tpu.pipeline_mode<synchronous>, transform_indices = @transform_5, window_bounds = array<i64: 128, 128>}, {pipeline_mode = #tpu.pipeline_mode<synchronous>, transform_indices = @transform_6, window_bounds = array<i64: 1, 128>}, {transform_indices = @transform_7, window_bounds = array<i64: 64, 128>}]} {
    %c0 = arith.constant 0 : index
    %c0_0 = arith.constant 0 : index
    %0 = vector.load %arg1[%c0, %c0_0] : memref<64x96xbf16, #tpu.memory_space<vmem>>, vector<64x96xbf16>
    %c0_1 = arith.constant 0 : index
    %c0_2 = arith.constant 0 : index
    %1 = vector.load %arg2[%c0_1, %c0_2] : memref<96x128xbf16, #tpu.memory_space<vmem>>, vector<96x128xbf16>
    %c0_3 = arith.constant 0 : index
    %c0_4 = arith.constant 0 : index
    %2 = vector.load %arg3[%c0_3, %c0_4] : memref<1x128xf32, #tpu.memory_space<vmem>>, vector<1x128xf32>
    %cst = arith.constant dense<0.000000e+00> : vector<64x128xf32>
    %3 = tpu.matmul %0, %1, %cst {dimension_numbers = #tpu.dot_dimension_numbers<[1], [0], [0], [1], [0, 0, 1, 1], [], []>} : vector<64x96xbf16>, vector<96x128xbf16>, vector<64x128xf32> -> vector<64x128xf32>
    %4 = vector.broadcast %2 : vector<1x128xf32> to vector<64x128xf32>
    %5 = arith.addf %3, %4 : vector<64x128xf32>
    %cst_5 = arith.constant 0.000000e+00 : f32
    %6 = vector.broadcast %cst_5 : f32 to vector<64x128xf32>
    %7 = arith.maximumf %5, %6 : vector<64x128xf32>
    %8 = arith.truncf %7 : vector<64x128xf32> to vector<64x128xbf16>
    %c0_6 = arith.constant 0 : index
    %c0_7 = arith.constant 0 : index
    %9 = vector.load %arg4[%c0_6, %c0_7] : memref<128x128xbf16, #tpu.memory_space<vmem>>, vector<128x128xbf16>
    %c0_8 = arith.constant 0 : index
    %c0_9 = arith.constant 0 : index
    %10 = vector.load %arg5[%c0_8, %c0_9] : memref<1x128xf32, #tpu.memory_space<vmem>>, vector<1x128xf32>
    %cst_10 = arith.constant dense<0.000000e+00> : vector<64x128xf32>
    %11 = tpu.matmul %8, %9, %cst_10 {dimension_numbers = #tpu.dot_dimension_numbers<[1], [0], [0], [1], [0, 0, 1, 1], [], []>} : vector<64x128xbf16>, vector<128x128xbf16>, vector<64x128xf32> -> vector<64x128xf32>
    %12 = vector.broadcast %10 : vector<1x128xf32> to vector<64x128xf32>
    %13 = arith.addf %11, %12 : vector<64x128xf32>
    %cst_11 = arith.constant 0.000000e+00 : f32
    %14 = vector.broadcast %cst_11 : f32 to vector<64x128xf32>
    %15 = arith.maximumf %13, %14 : vector<64x128xf32>
    %16 = arith.truncf %15 : vector<64x128xf32> to vector<64x128xbf16>
    %c0_12 = arith.constant 0 : index
    %c0_13 = arith.constant 0 : index
    %17 = vector.load %arg6[%c0_12, %c0_13] : memref<128x128xbf16, #tpu.memory_space<vmem>>, vector<128x128xbf16>
    %c0_14 = arith.constant 0 : index
    %c0_15 = arith.constant 0 : index
    %18 = vector.load %arg7[%c0_14, %c0_15] : memref<1x128xf32, #tpu.memory_space<vmem>>, vector<1x128xf32>
    %cst_16 = arith.constant dense<0.000000e+00> : vector<64x128xf32>
    %19 = tpu.matmul %16, %17, %cst_16 {dimension_numbers = #tpu.dot_dimension_numbers<[1], [0], [0], [1], [0, 0, 1, 1], [], []>} : vector<64x128xbf16>, vector<128x128xbf16>, vector<64x128xf32> -> vector<64x128xf32>
    %20 = vector.broadcast %18 : vector<1x128xf32> to vector<64x128xf32>
    %21 = arith.addf %19, %20 : vector<64x128xf32>
    %c0_17 = arith.constant 0 : index
    %c0_18 = arith.constant 0 : index
    %22 = vector.load %arg8[%c0_17, %c0_18] : memref<64x128xf32, #tpu.memory_space<vmem>>, vector<64x128xf32>
    tpu.vector_store %arg8[%c0_17, %c0_18], %21 {strides = array<i32>} : memref<64x128xf32, #tpu.memory_space<vmem>>, vector<64x128xf32>,
    return
  }
  func.func @transform_0(%arg0: i32) -> (i32, i32) {
    %c0_i32 = arith.constant 0 : i32
    %c0_i32_0 = arith.constant 0 : i32
    return %arg0, %c0_i32 : i32, i32
  }
  func.func @transform_1(%arg0: i32) -> (i32, i32) {
    %c0_i32 = arith.constant 0 : i32
    %c0_i32_0 = arith.constant 0 : i32
    %c0_i32_1 = arith.constant 0 : i32
    return %c0_i32, %c0_i32_0 : i32, i32
  }
  func.func @transform_2(%arg0: i32) -> (i32, i32) {
    %c0_i32 = arith.constant 0 : i32
    %c0_i32_0 = arith.constant 0 : i32
    %c0_i32_1 = arith.constant 0 : i32
    return %c0_i32, %c0_i32_0 : i32, i32
  }
  func.func @transform_3(%arg0: i32) -> (i32, i32) {
    %c0_i32 = arith.constant 0 : i32
    %c0_i32_0 = arith.constant 0 : i32
    %c0_i32_1 = arith.constant 0 : i32
    return %c0_i32, %c0_i32_0 : i32, i32
  }
  func.func @transform_4(%arg0: i32) -> (i32, i32) {
    %c0_i32 = arith.constant 0 : i32
    %c0_i32_0 = arith.constant 0 : i32
    %c0_i32_1 = arith.constant 0 : i32
    return %c0_i32, %c0_i32_0 : i32, i32
  }
  func.func @transform_5(%arg0: i32) -> (i32, i32) {
    %c0_i32 = arith.constant 0 : i32
    %c0_i32_0 = arith.constant 0 : i32
    %c0_i32_1 = arith.constant 0 : i32
    return %c0_i32, %c0_i32_0 : i32, i32
  }
  func.func @transform_6(%arg0: i32) -> (i32, i32) {
    %c0_i32 = arith.constant 0 : i32
    %c0_i32_0 = arith.constant 0 : i32
    %c0_i32_1 = arith.constant 0 : i32
    return %c0_i32, %c0_i32_0 : i32, i32
  }
  func.func @transform_7(%arg0: i32) -> (i32, i32) {
    %c0_i32 = arith.constant 0 : i32
    %c0_i32_0 = arith.constant 0 : i32
    return %arg0, %c0_i32 : i32, i32
  }
}

</mosaic_0001>

<llo_original>
// kernel: _forward_jit.1
$region0: #{_forward_jit.1}
  #allocation0 [shape = 'u32[]', space=smem, size = 0x4, offset = 0x4, fixed_abs, tag = 'smem constant byte address 0x4 - core index']
  #allocation1 [shape = 'u32[144,128]{1,0:T(1,128)}', space=vmem, size = 0x12000, scoped, tag = 'internal scratch']
  %s0 = inlined_call_operand.vmem [shape: bf16[64,96], index: 0, kind: input, shape index: {}]
  %s1 = inlined_call_operand.hbm [shape: bf16[96,128], index: 1, kind: input, shape index: {}]
  %s2 = inlined_call_operand.vmem [shape: f32[1,128], index: 2, kind: input, shape index: {}]
  %s3 = inlined_call_operand.vmem [shape: bf16[128,128], index: 3, kind: input, shape index: {}]
  %s4 = inlined_call_operand.vmem [shape: f32[1,128], index: 4, kind: input, shape index: {}]
  %s5 = inlined_call_operand.hbm [shape: bf16[128,128], index: 5, kind: input, shape index: {}]
  %s6 = inlined_call_operand.vmem [shape: f32[1,128], index: 6, kind: input, shape index: {}]
  %s7 = inlined_call_operand.vmem [shape: f32[64,128], index: 7, kind: output, shape index: {}]
  %s8 = sld [smem:[#allocation0]]
  $region46: #{_forward_jit.1} parent=0
    _
  %s10 = ssub.s32 1, %s8
  %s11 = scalar_select 0, %s10, %s8
  $region1: #{_forward_jit.1} parent=0
    #allocation2 [shape = 'u8[24576]{0}', space=vmem, size = 0x6000, scoped, tag = 'input window, operand 1, single buffered']
    #allocation3 [shape = 's32[1]{0}', space=sflag, size = 0x4, scoped, tag = 'scoped memory for _forward_jit.1']
    #allocation4 [shape = 'u8[32768]{0}', space=vmem, size = 0x8000, scoped, tag = 'input window, operand 5, single buffered']
    #allocation5 [shape = 's32[1]{0}', space=sflag, size = 0x4, scoped, tag = 'scoped memory for _forward_jit.1']
    %12 = vsyncpa [#allocation3], 0
    %13 = vsyncpa [#allocation5], 0
    // Predicated region
    $region2: #{_forward_jit.1} parent=1 // pred_check
      _
    $region3: #{_forward_jit.1} parent=1 // pred_check_branch
      %15 = sbr.rel (0) target = $region5
    $region4: #{_forward_jit.1} parent=1 // pred_region
      _
    $region5: #{_forward_jit.1} parent=1 // pred_fallthru
      _
    // Predicated region
    $region6: #{_forward_jit.1} parent=1 // pred_check
      _
    $region7: #{_forward_jit.1} parent=1 // pred_check_branch
      %17 = sbr.rel (0) target = $region9
    $region8: #{_forward_jit.1} parent=1 // pred_region
      %s19 = ssub.s32 768, 768
      %20 = vsyncadd [#allocation3], %s19
      %s21 = sshll.u32 [#allocation2], 4
      %s22 = int_to_ptr.vmem [resolvable:$true] %s21
      %27 = dma.hbm_to_vmem [thread:$0]  %s1, 768, %s22, [#allocation3], 64, 64, 4
    $region9: #{_forward_jit.1} parent=1 // pred_fallthru
      _
    // Predicated region
    $region10: #{_forward_jit.1} parent=1 // pred_check
      _
    $region11: #{_forward_jit.1} parent=1 // pred_check_branch
      %29 = sbr.rel (0) target = $region13
    $region12: #{_forward_jit.1} parent=1 // pred_region
      _
    $region13: #{_forward_jit.1} parent=1 // pred_fallthru
      _
    // Predicated region
    $region14: #{_forward_jit.1} parent=1 // pred_check
      _
    $region15: #{_forward_jit.1} parent=1 // pred_check_branch
      %31 = sbr.rel (0) target = $region17
    $region16: #{_forward_jit.1} parent=1 // pred_region
      _
    $region17: #{_forward_jit.1} parent=1 // pred_fallthru
      _
    // Predicated region
    $region18: #{_forward_jit.1} parent=1 // pred_check
      _
    $region19: #{_forward_jit.1} parent=1 // pred_check_branch
      %33 = sbr.rel (0) target = $region21
    $region20: #{_forward_jit.1} parent=1 // pred_region
      _
    $region21: #{_forward_jit.1} parent=1 // pred_fallthru
      _
    // Predicated region
    $region22: #{_forward_jit.1} parent=1 // pred_check
      _
    $region23: #{_forward_jit.1} parent=1 // pred_check_branch
      %35 = sbr.rel (0) target = $region25
    $region24: #{_forward_jit.1} parent=1 // pred_region
      %s37 = ssub.s32 1024, 1024
      %38 = vsyncadd [#allocation5], %s37
      %s39 = sshll.u32 [#allocation4], 4
      %s40 = int_to_ptr.vmem [resolvable:$true] %s39
      %45 = dma.hbm_to_vmem [thread:$0]  %s5, 1024, %s40, [#allocation5], 64, 64, 4
    $region25: #{_forward_jit.1} parent=1 // pred_fallthru
      _
    // Predicated region
    $region26: #{_forward_jit.1} parent=1 // pred_check
      _
    $region27: #{_forward_jit.1} parent=1 // pred_check_branch
      %47 = sbr.rel (0) target = $region29
    $region28: #{_forward_jit.1} parent=1 // pred_region
      _
    $region29: #{_forward_jit.1} parent=1 // pred_fallthru
      _
    // Predicated region
    $region30: #{_forward_jit.1} parent=1 // pred_check
      _
    $region31: #{_forward_jit.1} parent=1 // pred_check_branch
      %49 = sbr.rel (0) target = $region33
    $region32: #{_forward_jit.1} parent=1 // pred_region
      %50 = dma.done [#allocation3], 768
    $region33: #{_forward_jit.1} parent=1 // pred_fallthru
      _
    // Predicated region
    $region34: #{_forward_jit.1} parent=1 // pred_check
      _
    $region35: #{_forward_jit.1} parent=1 // pred_check_branch
      %52 = sbr.rel (0) target = $region37
    $region36: #{_forward_jit.1} parent=1 // pred_region
      %53 = dma.done [#allocation5], 1024
    $region37: #{_forward_jit.1} parent=1 // pred_fallthru
      _
    %v55 = vld [vmem:[%s0] sm:$0xf]
    %v56 = vld [vmem:[%s0 + $0x4] sm:$0xf]
    %v57 = vld [vmem:[%s0 + $0x8] sm:$0xf]
    %v58 = vld [vmem:[%s0 + $0xc] sm:$0xf]
    %v59 = vld [vmem:[%s0 + $0x10] sm:$0xf]
    %v60 = vld [vmem:[%s0 + $0x14] sm:$0xf]
    %v61 = vld [vmem:[%s0 + $0x18] sm:$0xf]
    %v62 = vld [vmem:[%s0 + $0x1c] sm:$0xf]
    %v63 = vld [vmem:[#allocation2] sm:$0xf]
    %v64 = vld [vmem:[#allocation2 + $0x4] sm:$0xf]
    %v65 = vld [vmem:[#allocation2 + $0x8] sm:$0xf]
    %v66 = vld [vmem:[#allocation2 + $0xc] sm:$0xf]
    %v67 = vld [vmem:[#allocation2 + $0x10] sm:$0xf]
    %v68 = vld [vmem:[#allocation2 + $0x14] sm:$0xf]
    %v69 = vld [vmem:[#allocation2 + $0x18] sm:$0xf]
    %v70 = vld [vmem:[#allocation2 + $0x1c] sm:$0xf]
    %v71 = vld [vmem:[#allocation2 + $0x20] sm:$0xf]
    %v72 = vld [vmem:[#allocation2 + $0x24] sm:$0xf]
    %v73 = vld [vmem:[#allocation2 + $0x28] sm:$0xf]
    %v74 = vld [vmem:[#allocation2 + $0x2c] sm:$0xf]
    %v75 = vld [vmem:[%s2] sm:$0x1]
    %v77 = vlaneseq
    %v78 = vshrl.u32 %v77, 7
    %v79 = vsub.s32 0, %v78
    %v80 = vrot.slane %v75, %v79
    %v90 = vunpack.c.l.b16 %v55
    %v91 = vunpack.c.l.b16 %v56
    %v92 = vunpack.c.l.b16 %v57
    %v93 = vunpack.c.l.b16 %v58
    %v94 = vunpack.c.l.b16 %v59
    %v95 = vunpack.c.l.b16 %v60
    %v96 = vunpack.c.l.b16 %v61
    %v97 = vunpack.c.l.b16 %v62
    %v98 = vpack.c.b16 %v91, %v90
    %v99 = vpack.c.b16 %v93, %v92
    %v100 = vpack.c.b16 %v95, %v94
    %v101 = vpack.c.b16 %v97, %v96
    %v114 = vunpack.c.l.b16 %v63
    %v115 = vunpack.c.l.b16 %v64
    %v116 = vunpack.c.l.b16 %v65
    %v117 = vunpack.c.l.b16 %v66
    %v118 = vunpack.c.l.b16 %v67
    %v119 = vunpack.c.l.b16 %v68
    %v120 = vunpack.c.l.b16 %v69
    %v121 = vunpack.c.l.b16 %v70
    %v122 = vunpack.c.l.b16 %v71
    %v123 = vunpack.c.l.b16 %v72
    %v124 = vunpack.c.l.b16 %v73
    %v125 = vunpack.c.l.b16 %v74
    %v126 = vpack.c.b16 %v115, %v114
    %v127 = vpack.c.b16 %v117, %v116
    %v128 = vpack.c.b16 %v119, %v118
    %v129 = vpack.c.b16 %v121, %v120
    %v130 = vpack.c.b16 %v123, %v122
    %v131 = vpack.c.b16 %v125, %v124
    %vm138 = vcmask 785408
    %v140 = vsel %vm138, %v98, 0
    %v143 = vsel %vm138, %v99, 0
    %v146 = vsel %vm138, %v100, 0
    %v149 = vsel %vm138, %v101, 0
    %151 = vmatprep.subr.bf16.mxu0 0
    %152 = vmatpush1.bf16.msra.mxu0 %v126
    %153 = vmatprep.subr.bf16.mxu0 0
    %154 = vmatpush1.bf16.msra.mxu0 %v127
    %155 = vmatprep.subr.bf16.mxu0 0
    %156 = vmatpush1.bf16.msra.mxu0 %v128
    %157 = vmatprep.subr.bf16.mxu0 0
    %158 = vmatpush1.bf16.msra.mxu0 %v129
    %159 = vmatprep.subr.bf16.mxu0 0
    %160 = vmatpush1.bf16.msra.mxu0 %v130
    %161 = vmatprep.subr.bf16.mxu0 0
    %162 = vmatpush1.bf16.msra.mxu0 %v131
    %163 = vmatprep.subr.bf16.mxu0 0
    %164 = vmatpush1.bf16.msra.mxu0 0
    %165 = vmatprep.subr.bf16.mxu0 0
    %166 = vmatpush1.bf16.msra.mxu0 0
    %167 = vmatprep.subr.bf16.mxu0 0
    %168 = vmatpush1.bf16.msra.mxu0 0
    %169 = vmatprep.subr.bf16.mxu0 0
    %170 = vmatpush1.bf16.msra.mxu0 0
    %171 = vmatprep.subr.bf16.mxu0 0
    %172 = vmatpush1.bf16.msra.mxu0 0
    %173 = vmatprep.subr.bf16.mxu0 0
    %174 = vmatpush1.bf16.msra.mxu0 0
    %175 = vmatprep.subr.bf16.mxu0 0
    %176 = vmatpush1.bf16.msra.mxu0 0
    %177 = vmatprep.subr.bf16.mxu0 0
    %178 = vmatpush1.bf16.msra.mxu0 0
    %179 = vmatprep.subr.bf16.mxu0 0
    %180 = vmatpush1.bf16.msra.mxu0 0
    %181 = vmatprep.subr.bf16.mxu0 0
    %182 = vmatpush1.bf16.msra.mxu0 0
    %183 = vmatprep.mubr.bf16.mxu0 0
    %184 = vmatmul.mubr.bf16.gmra.mrb[0].mxu0 %v140
    %v185 = vpop.f32.mrb[0].mxu0
    %v186 = vadd.f32 %v80, %v185
    %v187 = vpop.f32.mrb[0].mxu0
    %v188 = vpop.f32.mrb[0].mxu0
    %v189 = vadd.f32 %v80, %v188
    %v190 = vpop.f32.mrb[0].mxu0
    %191 = vmatprep.mubr.bf16.mxu0 0
    %192 = vmatmul.mubr.bf16.gmra.mrb[0].mxu0 %v143
    %v193 = vpop.f32.mrb[0].mxu0
    %v194 = vadd.f32 %v80, %v193
    %v195 = vpop.f32.mrb[0].mxu0
    %v196 = vpop.f32.mrb[0].mxu0
    %v197 = vadd.f32 %v80, %v196
    %v198 = vpop.f32.mrb[0].mxu0
    %199 = vmatprep.mubr.bf16.mxu0 0
    %200 = vmatmul.mubr.bf16.gmra.mrb[0].mxu0 %v146
    %v201 = vpop.f32.mrb[0].mxu0
    %v202 = vadd.f32 %v80, %v201
    %v203 = vpop.f32.mrb[0].mxu0
    %v204 = vpop.f32.mrb[0].mxu0
    %v205 = vadd.f32 %v80, %v204
    %v206 = vpop.f32.mrb[0].mxu0
    %207 = vmatprep.mubr.bf16.mxu0 0
    %208 = vmatmul.mubr.bf16.gmra.mrb[0].mxu0 %v149
    %v209 = vpop.f32.mrb[0].mxu0
    %v210 = vadd.f32 %v80, %v209
    %v211 = vpop.f32.mrb[0].mxu0
    %v212 = vpop.f32.mrb[0].mxu0
    %v213 = vadd.f32 %v80, %v212
    %v214 = vpop.f32.mrb[0].mxu0
    %215 = vdwg.mxu0
    %v216 = vmax.f32 %v186, 0.0
    %v217 = vmax.f32 %v189, 0.0
    %v218 = vmax.f32 %v194, 0.0
    %v219 = vmax.f32 %v197, 0.0
    %v220 = vmax.f32 %v202, 0.0
    %v221 = vmax.f32 %v205, 0.0
    %v222 = vmax.f32 %v210, 0.0
    %v223 = vmax.f32 %v213, 0.0
    %v224 = vpack.c.bf16 %v217, %v216
    %v225 = vpack.c.bf16 %v219, %v218
    %v226 = vpack.c.bf16 %v221, %v220
    %v227 = vpack.c.bf16 %v223, %v222
    %v228 = vld [vmem:[%s3] sm:$0xf]
    %v229 = vld [vmem:[%s3 + $0x4] sm:$0xf]
    %v230 = vld [vmem:[%s3 + $0x8] sm:$0xf]
    %v231 = vld [vmem:[%s3 + $0xc] sm:$0xf]
    %v232 = vld [vmem:[%s3 + $0x10] sm:$0xf]
    %v233 = vld [vmem:[%s3 + $0x14] sm:$0xf]
    %v234 = vld [vmem:[%s3 + $0x18] sm:$0xf]
    %v235 = vld [vmem:[%s3 + $0x1c] sm:$0xf]
    %v236 = vld [vmem:[%s3 + $0x20] sm:$0xf]
    %v237 = vld [vmem:[%s3 + $0x24] sm:$0xf]
    %v238 = vld [vmem:[%s3 + $0x28] sm:$0xf]
    %v239 = vld [vmem:[%s3 + $0x2c] sm:$0xf]
    %v240 = vld [vmem:[%s3 + $0x30] sm:$0xf]
    %v241 = vld [vmem:[%s3 + $0x34] sm:$0xf]
    %v242 = vld [vmem:[%s3 + $0x38] sm:$0xf]
    %v243 = vld [vmem:[%s3 + $0x3c] sm:$0xf]
    %v244 = vld [vmem:[%s4] sm:$0x1]
    %v246 = vlaneseq
    %v247 = vshrl.u32 %v246, 7
    %v248 = vsub.s32 0, %v247
    %v249 = vrot.slane %v244, %v248
    %v267 = vunpack.c.l.b16 %v228
    %v268 = vunpack.c.l.b16 %v229
    %v269 = vunpack.c.l.b16 %v230
    %v270 = vunpack.c.l.b16 %v231
    %v271 = vunpack.c.l.b16 %v232
    %v272 = vunpack.c.l.b16 %v233
    %v273 = vunpack.c.l.b16 %v234
    %v274 = vunpack.c.l.b16 %v235
    %v275 = vunpack.c.l.b16 %v236
    %v276 = vunpack.c.l.b16 %v237
    %v277 = vunpack.c.l.b16 %v238
    %v278 = vunpack.c.l.b16 %v239
    %v279 = vunpack.c.l.b16 %v240
    %v280 = vunpack.c.l.b16 %v241
    %v281 = vunpack.c.l.b16 %v242
    %v282 = vunpack.c.l.b16 %v243
    %v283 = vpack.c.b16 %v268, %v267
    %v284 = vpack.c.b16 %v270, %v269
    %v285 = vpack.c.b16 %v272, %v271
    %v286 = vpack.c.b16 %v274, %v273
    %v287 = vpack.c.b16 %v276, %v275
    %v288 = vpack.c.b16 %v278, %v277
    %v289 = vpack.c.b16 %v280, %v279
    %v290 = vpack.c.b16 %v282, %v281
    %299 = vmatprep.subr.bf16.mxu0 0
    %300 = vmatpush1.bf16.msra.mxu0 %v283
    %301 = vmatprep.subr.bf16.mxu0 0
    %302 = vmatpush1.bf16.msra.mxu0 %v284
    %303 = vmatprep.subr.bf16.mxu0 0
    %304 = vmatpush1.bf16.msra.mxu0 %v285
    %305 = vmatprep.subr.bf16.mxu0 0
    %306 = vmatpush1.bf16.msra.mxu0 %v286
    %307 = vmatprep.subr.bf16.mxu0 0
    %308 = vmatpush1.bf16.msra.mxu0 %v287
    %309 = vmatprep.subr.bf16.mxu0 0
    %310 = vmatpush1.bf16.msra.mxu0 %v288
    %311 = vmatprep.subr.bf16.mxu0 0
    %312 = vmatpush1.bf16.msra.mxu0 %v289
    %313 = vmatprep.subr.bf16.mxu0 0
    %314 = vmatpush1.bf16.msra.mxu0 %v290
    %315 = vmatprep.subr.bf16.mxu0 0
    %316 = vmatpush1.bf16.msra.mxu0 0
    %317 = vmatprep.subr.bf16.mxu0 0
    %318 = vmatpush1.bf16.msra.mxu0 0
    %319 = vmatprep.subr.bf16.mxu0 0
    %320 = vmatpush1.bf16.msra.mxu0 0
    %321 = vmatprep.subr.bf16.mxu0 0
    %322 = vmatpush1.bf16.msra.mxu0 0
    %323 = vmatprep.subr.bf16.mxu0 0
    %324 = vmatpush1.bf16.msra.mxu0 0
    %325 = vmatprep.subr.bf16.mxu0 0
    %326 = vmatpush1.bf16.msra.mxu0 0
    %327 = vmatprep.subr.bf16.mxu0 0
    %328 = vmatpush1.bf16.msra.mxu0 0
    %329 = vmatprep.subr.bf16.mxu0 0
    %330 = vmatpush1.bf16.msra.mxu0 0
    %331 = vmatprep.mubr.bf16.mxu0 0
    %332 = vmatmul.mubr.bf16.gmra.mrb[0].mxu0 %v224
    %v333 = vpop.f32.mrb[0].mxu0
    %v334 = vadd.f32 %v249, %v333
    %v335 = vpop.f32.mrb[0].mxu0
    %v336 = vpop.f32.mrb[0].mxu0
    %v337 = vadd.f32 %v249, %v336
    %v338 = vpop.f32.mrb[0].mxu0
    %339 = vmatprep.mubr.bf16.mxu0 0
    %340 = vmatmul.mubr.bf16.gmra.mrb[0].mxu0 %v225
    %v341 = vpop.f32.mrb[0].mxu0
    %v342 = vadd.f32 %v249, %v341
    %v343 = vpop.f32.mrb[0].mxu0
    %v344 = vpop.f32.mrb[0].mxu0
    %v345 = vadd.f32 %v249, %v344
    %v346 = vpop.f32.mrb[0].mxu0
    %347 = vmatprep.mubr.bf16.mxu0 0
    %348 = vmatmul.mubr.bf16.gmra.mrb[0].mxu0 %v226
    %v349 = vpop.f32.mrb[0].mxu0
    %v350 = vadd.f32 %v249, %v349
    %v351 = vpop.f32.mrb[0].mxu0
    %v352 = vpop.f32.mrb[0].mxu0
    %v353 = vadd.f32 %v249, %v352
    %v354 = vpop.f32.mrb[0].mxu0
    %355 = vmatprep.mubr.bf16.mxu0 0
    %356 = vmatmul.mubr.bf16.gmra.mrb[0].mxu0 %v227
    %v357 = vpop.f32.mrb[0].mxu0
    %v358 = vadd.f32 %v249, %v357
    %v359 = vpop.f32.mrb[0].mxu0
    %v360 = vpop.f32.mrb[0].mxu0
    %v361 = vadd.f32 %v249, %v360
    %v362 = vpop.f32.mrb[0].mxu0
    %363 = vdwg.mxu0
    %v364 = vmax.f32 %v334, 0.0
    %v365 = vmax.f32 %v337, 0.0
    %v366 = vmax.f32 %v342, 0.0
    %v367 = vmax.f32 %v345, 0.0
    %v368 = vmax.f32 %v350, 0.0
    %v369 = vmax.f32 %v353, 0.0
    %v370 = vmax.f32 %v358, 0.0
    %v371 = vmax.f32 %v361, 0.0
    %v372 = vpack.c.bf16 %v365, %v364
    %v373 = vpack.c.bf16 %v367, %v366
    %v374 = vpack.c.bf16 %v369, %v368
    %v375 = vpack.c.bf16 %v371, %v370
    %v376 = vld [vmem:[#allocation4] sm:$0xf]
    %v377 = vld [vmem:[#allocation4 + $0x4] sm:$0xf]
    %v378 = vld [vmem:[#allocation4 + $0x8] sm:$0xf]
    %v379 = vld [vmem:[#allocation4 + $0xc] sm:$0xf]
    %v380 = vld [vmem:[#allocation4 + $0x10] sm:$0xf]
    %v381 = vld [vmem:[#allocation4 + $0x14] sm:$0xf]
    %v382 = vld [vmem:[#allocation4 + $0x18] sm:$0xf]
    %v383 = vld [vmem:[#allocation4 + $0x1c] sm:$0xf]
    %v384 = vld [vmem:[#allocation4 + $0x20] sm:$0xf]
    %v385 = vld [vmem:[#allocation4 + $0x24] sm:$0xf]
    %v386 = vld [vmem:[#allocation4 + $0x28] sm:$0xf]
    %v387 = vld [vmem:[#allocation4 + $0x2c] sm:$0xf]
    %v388 = vld [vmem:[#allocation4 + $0x30] sm:$0xf]
    %v389 = vld [vmem:[#allocation4 + $0x34] sm:$0xf]
    %v390 = vld [vmem:[#allocation4 + $0x38] sm:$0xf]
    %v391 = vld [vmem:[#allocation4 + $0x3c] sm:$0xf]
    %v392 = vld [vmem:[%s6] sm:$0x1]
    %v394 = vlaneseq
    %v395 = vshrl.u32 %v394, 7
    %v396 = vsub.s32 0, %v395
    %v397 = vrot.slane %v392, %v396
    %v415 = vunpack.c.l.b16 %v376
    %v416 = vunpack.c.l.b16 %v377
    %v417 = vunpack.c.l.b16 %v378
    %v418 = vunpack.c.l.b16 %v379
    %v419 = vunpack.c.l.b16 %v380
    %v420 = vunpack.c.l.b16 %v381
    %v421 = vunpack.c.l.b16 %v382
    %v422 = vunpack.c.l.b16 %v383
    %v423 = vunpack.c.l.b16 %v384
    %v424 = vunpack.c.l.b16 %v385
    %v425 = vunpack.c.l.b16 %v386
    %v426 = vunpack.c.l.b16 %v387
    %v427 = vunpack.c.l.b16 %v388
    %v428 = vunpack.c.l.b16 %v389
    %v429 = vunpack.c.l.b16 %v390
    %v430 = vunpack.c.l.b16 %v391
    %v431 = vpack.c.b16 %v416, %v415
    %v432 = vpack.c.b16 %v418, %v417
    %v433 = vpack.c.b16 %v420, %v419
    %v434 = vpack.c.b16 %v422, %v421
    %v435 = vpack.c.b16 %v424, %v423
    %v436 = vpack.c.b16 %v426, %v425
    %v437 = vpack.c.b16 %v428, %v427
    %v438 = vpack.c.b16 %v430, %v429
    %447 = vmatprep.subr.bf16.mxu0 0
    %448 = vmatpush1.bf16.msra.mxu0 %v431
    %449 = vmatprep.subr.bf16.mxu0 0
    %450 = vmatpush1.bf16.msra.mxu0 %v432
    %451 = vmatprep.subr.bf16.mxu0 0
    %452 = vmatpush1.bf16.msra.mxu0 %v433
    %453 = vmatprep.subr.bf16.mxu0 0
    %454 = vmatpush1.bf16.msra.mxu0 %v434
    %455 = vmatprep.subr.bf16.mxu0 0
    %456 = vmatpush1.bf16.msra.mxu0 %v435
    %457 = vmatprep.subr.bf16.mxu0 0
    %458 = vmatpush1.bf16.msra.mxu0 %v436
    %459 = vmatprep.subr.bf16.mxu0 0
    %460 = vmatpush1.bf16.msra.mxu0 %v437
    %461 = vmatprep.subr.bf16.mxu0 0
    %462 = vmatpush1.bf16.msra.mxu0 %v438
    %463 = vmatprep.subr.bf16.mxu0 0
    %464 = vmatpush1.bf16.msra.mxu0 0
    %465 = vmatprep.subr.bf16.mxu0 0
    %466 = vmatpush1.bf16.msra.mxu0 0
    %467 = vmatprep.subr.bf16.mxu0 0
    %468 = vmatpush1.bf16.msra.mxu0 0
    %469 = vmatprep.subr.bf16.mxu0 0
    %470 = vmatpush1.bf16.msra.mxu0 0
    %471 = vmatprep.subr.bf16.mxu0 0
    %472 = vmatpush1.bf16.msra.mxu0 0
    %473 = vmatprep.subr.bf16.mxu0 0
    %474 = vmatpush1.bf16.msra.mxu0 0
    %475 = vmatprep.subr.bf16.mxu0 0
    %476 = vmatpush1.bf16.msra.mxu0 0
    %477 = vmatprep.subr.bf16.mxu0 0
    %478 = vmatpush1.bf16.msra.mxu0 0
    %479 = vmatprep.mubr.bf16.mxu0 0
    %480 = vmatmul.mubr.bf16.gmra.mrb[0].mxu0 %v372
    %v481 = vpop.f32.mrb[0].mxu0
    %v482 = vadd.f32 %v397, %v481
    %v483 = vpop.f32.mrb[0].mxu0
    %v484 = vpop.f32.mrb[0].mxu0
    %v485 = vadd.f32 %v397, %v484
    %v486 = vpop.f32.mrb[0].mxu0
    %487 = vmatprep.mubr.bf16.mxu0 0
    %488 = vmatmul.mubr.bf16.gmra.mrb[0].mxu0 %v373
    %v489 = vpop.f32.mrb[0].mxu0
    %v490 = vadd.f32 %v397, %v489
    %v491 = vpop.f32.mrb[0].mxu0
    %v492 = vpop.f32.mrb[0].mxu0
    %v493 = vadd.f32 %v397, %v492
    %v494 = vpop.f32.mrb[0].mxu0
    %495 = vmatprep.mubr.bf16.mxu0 0
    %496 = vmatmul.mubr.bf16.gmra.mrb[0].mxu0 %v374
    %v497 = vpop.f32.mrb[0].mxu0
    %v498 = vadd.f32 %v397, %v497
    %v499 = vpop.f32.mrb[0].mxu0
    %v500 = vpop.f32.mrb[0].mxu0
    %v501 = vadd.f32 %v397, %v500
    %v502 = vpop.f32.mrb[0].mxu0
    %503 = vmatprep.mubr.bf16.mxu0 0
    %504 = vmatmul.mubr.bf16.gmra.mrb[0].mxu0 %v375
    %v505 = vpop.f32.mrb[0].mxu0
    %v506 = vadd.f32 %v397, %v505
    %v507 = vpop.f32.mrb[0].mxu0
    %v508 = vpop.f32.mrb[0].mxu0
    %v509 = vadd.f32 %v397, %v508
    %v510 = vpop.f32.mrb[0].mxu0
    %511 = vdwg.mxu0
    %512 = vst [vmem:[%s7] sm:$0xff] %v482
    %513 = vst [vmem:[%s7 + $0x8] sm:$0xff] %v485
    %514 = vst [vmem:[%s7 + $0x10] sm:$0xff] %v490
    %515 = vst [vmem:[%s7 + $0x18] sm:$0xff] %v493
    %516 = vst [vmem:[%s7 + $0x20] sm:$0xff] %v498
    %517 = vst [vmem:[%s7 + $0x28] sm:$0xff] %v501
    %518 = vst [vmem:[%s7 + $0x30] sm:$0xff] %v506
    %519 = vst [vmem:[%s7 + $0x38] sm:$0xff] %v509
    // Predicated region
    $region38: #{_forward_jit.1} parent=1 // pred_check
      _
    $region39: #{_forward_jit.1} parent=1 // pred_check_branch
      %521 = sbr.rel (0) target = $region41
    $region40: #{_forward_jit.1} parent=1 // pred_region
      _
    $region41: #{_forward_jit.1} parent=1 // pred_fallthru
      _
    // Predicated region
    $region42: #{_forward_jit.1} parent=1 // pred_check
      _
    $region43: #{_forward_jit.1} parent=1 // pred_check_branch
      %523 = sbr.rel (0) target = $region45
    $region44: #{_forward_jit.1} parent=1 // pred_region
      _
    $region45: #{_forward_jit.1} parent=1 // pred_fallthru
      _
    %524 = vsyncpa [#allocation3], 1
    %525 = vsyncpa [#allocation5], 1

</llo_original>
